<compile_context>
chip_gen: v7x
topology: tpu7x:2x2x1
jax: 0.10.0
libtpu: 0.0.40
codegen_flags: <defaults>
</compile_context>

<pallas_src>
import functools

import jax
import jax.numpy as jnp
import numpy as np
from jax.experimental import pallas as pl
from jax.experimental.pallas import tpu as pltpu


def _atriplet_kernel(alpha, beta,
                     x_tile_ref, x_all_ref, sq_all_ref, t_tile_ref, t_all_ref,
                     pos_d_ref, loss_ref, cnt_ref):
    ta = x_tile_ref.shape[0]          # anchors in this tile
    n = x_all_ref.shape[0]            # full batch size
    km1 = pos_d_ref.shape[1]          # positives per anchor (K - 1)

    xt = x_tile_ref[...].astype(jnp.float32)     # (TA, d)
    xa = x_all_ref[...].astype(jnp.float32)      # (n,  d)

    # --- pairwise euclidean distances for this anchor tile (MXU matmul) ---
    sq_t = jnp.sum(xt * xt, axis=1, keepdims=True)                   # (TA, 1)
    gram = jax.lax.dot_general(xt, xa, (((1,), (1,)), ((), ())),
                               preferred_element_type=jnp.float32)   # (TA, n)
    dist = jnp.sqrt(jnp.maximum(sq_t + sq_all_ref[...] - 2.0 * gram, 1e-12))

    # --- masks built in-kernel from int32 targets (no dense f32 mask DMA) ---
    t_t = t_tile_ref[...]                                            # (TA, 1)
    t_a = t_all_ref[...]                                             # (1, n)
    same = t_t == t_a                                                # (TA, n)
    col = jax.lax.broadcasted_iota(jnp.int32, (ta, n), 1)
    row = pl.program_id(0) * ta + jax.lax.broadcasted_iota(jnp.int32, (ta, 1), 0)
    row_ok = row < n                                                 # padded edge rows
    pos2d = jnp.logical_and(same, col != row)                        # same class, off-diag
    neg2d = jnp.logical_not(same)                                    # different class

    # --- per-anchor adaptive weight a_lr ---
    e = jnp.exp(alpha * (1.0 - dist))                                # (TA, n)
    pos_logit = jnp.sum(jnp.where(pos2d, e, 0.0), axis=1, keepdims=True)
    neg_logit = jnp.sum(jnp.where(neg2d, e, 0.0), axis=1, keepdims=True)
    denom = pos_logit + neg_logit
    # Guard: if every exp underflowed, PyTorch would produce NaN; we emit 0.
    a_lr = jnp.where(denom > 0.0,
                     1.0 - pos_logit / jnp.maximum(denom, 1e-30), 0.0)

    # --- per-positive loop over K-1 offsets on 2-D (TA, n) tiles ---
    beta_dist = beta * dist                                          # hoisted invariant
    bpd = beta * pos_d_ref[...].astype(jnp.float32)                  # (TA, K-1), hoisted
    # softplus is monotone: trip > 0.65  <=>  z > log(exp(0.65) - 1)
    z_thresh = float(np.log(np.exp(0.65) - 1.0))

    s = jnp.zeros((ta, 1), jnp.float32)
    c = jnp.zeros((ta, 1), jnp.float32)
    for p in range(km1):                       # static unroll, K-1 is tiny
        z = bpd[:, p:p + 1] - beta_dist                              # (TA, n)
        valid = jnp.logical_and(z > z_thresh, neg2d)
        trip = jnp.maximum(z, 0.0) + jnp.log(1.0 + jnp.exp(-jnp.abs(z)))
        s = s + jnp.sum(jnp.where(valid, trip, 0.0), axis=1, keepdims=True)
        c = c + jnp.sum(jnp.where(valid, 1.0, 0.0), axis=1, keepdims=True)

    # Guard: anchors with zero valid triplets contribute 0 (PyTorch would NaN).
    ok = jnp.logical_and(row_ok, c > 0.0)
    loss_ref[...] = jnp.where(ok, a_lr * (s / jnp.maximum(c, 1.0)), 0.0)
    cnt_ref[...] = jnp.where(row_ok, c, 0.0)


def _vmem_limit_bytes():
    """Generation-aware VMEM limit: ~3/4 of capacity, capped at 96 MiB
    (=> ~48 MiB on v7x's 64 MiB per-TC VMEM, ~96 MiB on v5e/v6e's 128 MiB)."""
    cap = 64 << 20                      # conservative default if query fails
    try:
        info = pltpu.get_tpu_info()
        cap = int(getattr(info, "vmem_capacity_bytes", cap))
    except Exception:
        pass
    return int(max(min(cap * 3 // 4, 96 << 20), 32 << 20))


def _choose_anchor_tile(n, d, km1, vmem_limit_bytes):
    """Largest MXU/sublane-friendly anchor-tile size whose footprint (resident
    full-x + double-buffered tile inputs/outputs + live (TA, n) f32 slabs)
    stays inside the per-generation VMEM limit."""
    # Grid-invariant residents (assume the pipeline double-buffers them) plus
    # compiler-internal scratch headroom.
    fixed = 2 * (n * d + 2 * n) * 4 + (6 << 20)
    # Per anchor row: ~7 live (1, n) f32 slab rows (dist, beta*dist, e, z, trip,
    # masks/selects) + double-buffered x_tile / pos_d / targets / output rows.
    per_row = 7 * n * 4 + 2 * (d + km1 + 4) * 4
    avail = vmem_limit_bytes - fixed
    ta = max(avail // per_row, 8)
    n_pad = -(-n // 8) * 8
    if ta >= n_pad:                      # one tile covers the whole batch
        return int(n_pad)
    for align in (256, 128, 8):          # MXU-friendly first, sublane minimum last
        if ta >= align:
            return int(ta // align * align)
    return 8


def atriplet_loss(inputs, targets, alpha=40.0, beta=4.0):
    """Pallas implementation of ATriplet.forward (returns a scalar)."""
    x = jnp.asarray(inputs, jnp.float32)
    targets = jnp.asarray(targets, jnp.int32)
    n, d = x.shape

    # Balanced-batch bookkeeping (PyTorch's resize() assumes exactly K per class).
    same = targets[:, None] == targets[None, :]
    counts = np.asarray(jnp.sum(same.astype(jnp.int32), axis=1))
    k = int(counts[0])
    assert k >= 2 and np.all(counts == k), "ATriplet assumes a balanced P x K batch"
    km1 = k - 1

    # Column indices of each anchor's K-1 positives (ascending == masked_select
    # order; the order is irrelevant for the final sums).
    col = jnp.arange(n, dtype=jnp.int32)
    pos_bool = jnp.logical_and(same, col[None, :] != col[:, None])
    keys = jnp.where(pos_bool, col[None, :], n + col[None, :])
    pos_idx = jnp.sort(keys, axis=1)[:, :km1].astype(jnp.int32)      # (n, K-1)

    # Grid-invariant precompute in the wrapper (cheap, O(n*K*d)):
    #  * sq      : squared row norms of the full batch
    #  * pos_d   : per-anchor positive distances, same clamp/sqrt formula as in-kernel
    sq = jnp.sum(x * x, axis=1)                                      # (n,)
    x_pos = x[pos_idx]                                               # (n, K-1, d)
    ip = jnp.einsum('nd,nkd->nk', x, x_pos)
    pos_d = jnp.sqrt(jnp.maximum(sq[:, None] + sq[pos_idx] - 2.0 * ip, 1e-12))
    pos_d = pos_d.astype(jnp.float32)                                # (n, K-1)

    vmem_limit = _vmem_limit_bytes()
    ta = _choose_anchor_tile(n, d, km1, vmem_limit)
    grid = (pl.cdiv(n, ta),)

    sq_row = sq.reshape(1, n).astype(jnp.float32)
    t_col = targets.reshape(n, 1)
    t_row = targets.reshape(1, n)

    kernel = functools.partial(_atriplet_kernel, float(alpha), float(beta))
    loss_vec, cnt_vec = pl.pallas_call(
        kernel,
        grid=grid,
        in_specs=[
            pl.BlockSpec((ta, d), lambda i: (i, 0)),     # anchor rows of x
            pl.BlockSpec((n, d), lambda i: (0, 0)),      # full x (resident)
            pl.BlockSpec((1, n), lambda i: (0, 0)),      # squared norms of full x
            pl.BlockSpec((ta, 1), lambda i: (i, 0)),     # anchor targets
            pl.BlockSpec((1, n), lambda i: (0, 0)),      # all targets
            pl.BlockSpec((ta, km1), lambda i: (i, 0)),   # per-anchor positive dists
        ],
        out_specs=(
            pl.BlockSpec((ta, 1), lambda i: (i, 0)),
            pl.BlockSpec((ta, 1), lambda i: (i, 0)),
        ),
        out_shape=(
            jax.ShapeDtypeStruct((n, 1), jnp.float32),   # per-anchor weighted loss
            jax.ShapeDtypeStruct((n, 1), jnp.float32),   # per-anchor valid-triplet count
        ),
        compiler_params=pltpu.CompilerParams(
            dimension_semantics=("parallel",),           # megacore shard on v7x
            vmem_limit_bytes=vmem_limit,
        ),
    )(x, x, sq_row, t_col, t_row, pos_d)

    total_loss = jnp.sum(loss_vec)
    total_cnt = jnp.sum(cnt_vec)
    return jnp.where(total_cnt > 0.0, total_loss / total_cnt, jnp.float32(0.0))


def _reference(inputs, targets, alpha=40.0, beta=4.0):
    """Pure-JAX reference mirroring the PyTorch forward (mask-based, same math)."""
    x = inputs.astype(jnp.float32)
    n = x.shape[0]
    sq = jnp.sum(x * x, axis=1, keepdims=True)
    dist = jnp.sqrt(jnp.maximum(sq + sq.T - 2.0 * (x @ x.T), 1e-12))
    same = targets[:, None] == targets[None, :]
    pos = jnp.logical_and(same, ~jnp.eye(n, dtype=bool))
    neg = ~same
    e = jnp.exp(alpha * (1.0 - dist))
    pos_logit = jnp.sum(jnp.where(pos, e, 0.0), axis=1, keepdims=True)
    neg_logit = jnp.sum(jnp.where(neg, e, 0.0), axis=1, keepdims=True)
    a_lr = 1.0 - pos_logit / (pos_logit + neg_logit)
    trip = jnp.log(jnp.exp(beta * (dist[:, :, None] - dist[:, None, :])) + 1.0)
    m3 = jnp.logical_and(pos[:, :, None], neg[:, None, :])
    valid = jnp.logical_and(trip > 0.65, m3)
    s = jnp.sum(jnp.where(valid, trip, 0.0), axis=(1, 2))
    c = jnp.sum(valid, axis=(1, 2)).astype(jnp.float32)
    loss_i = jnp.where(c > 0.0, a_lr[:, 0] * s / jnp.maximum(c, 1.0), 0.0)
    tot_c = jnp.sum(c)
    return jnp.where(tot_c > 0.0, jnp.sum(loss_i) / tot_c, 0.0)


if __name__ == "__main__":
    key = jax.random.PRNGKey(0)
    k1, k2 = jax.random.split(key)

    # Case 1: balanced "P x K" batch, 4 classes x 4 instances, 32-d unit-norm.
    p_classes, k_inst, d = 4, 4, 32
    n = p_classes * k_inst
    targets = jnp.repeat(jnp.arange(p_classes, dtype=jnp.int32), k_inst)
    x = jax.random.normal(k1, (n, d), dtype=jnp.float32)
    x = x / jnp.linalg.norm(x, axis=1, keepdims=True)

    loss = jax.block_until_ready(atriplet_loss(x, targets, alpha=40.0, beta=4.0))
    ref = _reference(x, targets, alpha=40.0, beta=4.0)
    # Tolerance note: borderline (trip ~ 0.65) triplets may count differently
    # between the MXU-based kernel distances and the XLA reference; each flip
    # moves the scalar by <~0.5%, so allow 2% relative.
    np.testing.assert_allclose(np.asarray(loss), np.asarray(ref),
                               rtol=2e-2, atol=1e-5)

    # Case 2: 5 classes x 3 instances (n=15) exercises the cdiv grid and the
    # padded / row-masked edge tile.
    p2, k2_inst, d2 = 5, 3, 48
    n2 = p2 * k2_inst
    targets2 = jnp.repeat(jnp.arange(p2, dtype=jnp.int32), k2_inst)
    x2 = jax.random.normal(k2, (n2, d2), dtype=jnp.float32)
    x2 = x2 / jnp.linalg.norm(x2, axis=1, keepdims=True)
    loss2 = jax.block_until_ready(atriplet_loss(x2, targets2, alpha=40.0, beta=4.0))
    ref2 = _reference(x2, targets2, alpha=40.0, beta=4.0)
    np.testing.assert_allclose(np.asarray(loss2), np.asarray(ref2),
                               rtol=2e-2, atol=1e-5)

    print("KERNEL_OK")
</pallas_src>

<mosaic_0001>
module attributes {stable_mosaic.version = 11 : i64} {
  func.func @_atriplet_kernel(%arg0: i32, %arg1: memref<16x32xf32, #tpu.memory_space<vmem>>, %arg2: memref<16x32xf32, #tpu.memory_space<vmem>>, %arg3: memref<1x16xf32, #tpu.memory_space<vmem>>, %arg4: memref<16x1xi32, #tpu.memory_space<vmem>>, %arg5: memref<1x16xi32, #tpu.memory_space<vmem>>, %arg6: memref<16x3xf32, #tpu.memory_space<vmem>>, %arg7: memref<16x1xf32, #tpu.memory_space<vmem>>, %arg8: memref<16x1xf32, #tpu.memory_space<vmem>>) attributes {dimension_semantics = [#tpu.dimension_semantics<parallel>], iteration_bounds = array<i64: 1>, scalar_prefetch = 0 : i64, scratch_operands = 0 : i64, tpu.core_type = #tpu.core_type<tc>, window_params = [{transform_indices = @transform_0, window_bounds = array<i64: 16, 32>}, {pipeline_mode = #tpu.pipeline_mode<synchronous>, transform_indices = @transform_1, window_bounds = array<i64: 16, 32>}, {pipeline_mode = #tpu.pipeline_mode<synchronous>, transform_indices = @transform_2, window_bounds = array<i64: 1, 16>}, {transform_indices = @transform_3, window_bounds = array<i64: 16, 1>}, {pipeline_mode = #tpu.pipeline_mode<synchronous>, transform_indices = @transform_4, window_bounds = array<i64: 1, 16>}, {transform_indices = @transform_5, window_bounds = array<i64: 16, 3>}, {transform_indices = @transform_6, window_bounds = array<i64: 16, 1>}, {transform_indices = @transform_7, window_bounds = array<i64: 16, 1>}]} {
    %c0 = arith.constant 0 : index
    %c0_0 = arith.constant 0 : index
    %0 = vector.load %arg1[%c0, %c0_0] : memref<16x32xf32, #tpu.memory_space<vmem>>, vector<16x32xf32>
    %c0_1 = arith.constant 0 : index
    %c0_2 = arith.constant 0 : index
    %1 = vector.load %arg2[%c0_1, %c0_2] : memref<16x32xf32, #tpu.memory_space<vmem>>, vector<16x32xf32>
    %2 = arith.mulf %0, %0 : vector<16x32xf32>
    %cst = arith.constant dense<0.000000e+00> : vector<16xf32>
    %3 = vector.multi_reduction <add>, %2, %cst [1] : vector<16x32xf32> to vector<16xf32>
    %4 = vector.shape_cast %3 : vector<16xf32> to vector<16x1xf32>
    %cst_3 = arith.constant dense<0.000000e+00> : vector<16x16xf32>
    %5 = tpu.matmul %0, %1, %cst_3 {dimension_numbers = #tpu.dot_dimension_numbers<[1], [1], [0], [0], [0, 0, 1, 0], [], []>} : vector<16x32xf32>, vector<16x32xf32>, vector<16x16xf32> -> vector<16x16xf32>
    %c0_4 = arith.constant 0 : index
    %c0_5 = arith.constant 0 : index
    %6 = vector.load %arg3[%c0_4, %c0_5] : memref<1x16xf32, #tpu.memory_space<vmem>>, vector<1x16xf32>
    %7 = vector.broadcast %4 : vector<16x1xf32> to vector<16x16xf32>
    %8 = vector.broadcast %6 : vector<1x16xf32> to vector<16x16xf32>
    %9 = arith.addf %7, %8 : vector<16x16xf32>
    %cst_6 = arith.constant 2.000000e+00 : f32
    %10 = vector.broadcast %cst_6 : f32 to vector<16x16xf32>
    %11 = arith.mulf %10, %5 : vector<16x16xf32>
    %12 = arith.subf %9, %11 : vector<16x16xf32>
    %cst_7 = arith.constant 9.99999996E-13 : f32
    %13 = vector.broadcast %cst_7 : f32 to vector<16x16xf32>
    %14 = arith.maximumf %12, %13 : vector<16x16xf32>
    %15 = math.sqrt %14 : vector<16x16xf32>
    %c0_8 = arith.constant 0 : index
    %c0_9 = arith.constant 0 : index
    %16 = vector.load %arg4[%c0_8, %c0_9] : memref<16x1xi32, #tpu.memory_space<vmem>>, vector<16x1xi32>
    %c0_10 = arith.constant 0 : index
    %c0_11 = arith.constant 0 : index
    %17 = vector.load %arg5[%c0_10, %c0_11] : memref<1x16xi32, #tpu.memory_space<vmem>>, vector<1x16xi32>
    %18 = vector.broadcast %16 : vector<16x1xi32> to vector<16x16xi32>
    %19 = vector.broadcast %17 : vector<1x16xi32> to vector<16x16xi32>
    %20 = arith.cmpi eq, %18, %19 : vector<16x16xi32>
    %21 = tpu.iota {dimensions = array<i32: 1>} : vector<16x16xi32>
    %c16_i32 = arith.constant 16 : i32
    %22 = arith.muli %arg0, %c16_i32 : i32
    %23 = tpu.iota {dimensions = array<i32: 0>} : vector<16x1xi32>
    %24 = vector.broadcast %22 : i32 to vector<16x1xi32>
    %25 = arith.addi %24, %23 : vector<16x1xi32>
    %c16_i32_12 = arith.constant 16 : i32
    %26 = vector.broadcast %c16_i32_12 : i32 to vector<16x1xi32>
    %27 = arith.cmpi slt, %25, %26 : vector<16x1xi32>
    %28 = vector.broadcast %25 : vector<16x1xi32> to vector<16x16xi32>
    %29 = arith.cmpi ne, %21, %28 : vector<16x16xi32>
    %30 = arith.andi %20, %29 : vector<16x16xi1>
    %cst_13 = arith.constant dense<true> : vector<16x16xi1>
    %31 = arith.xori %20, %cst_13 : vector<16x16xi1>
    %cst_14 = arith.constant 1.000000e+00 : f32
    %32 = vector.broadcast %cst_14 : f32 to vector<16x16xf32>
    %33 = arith.subf %32, %15 : vector<16x16xf32>
    %cst_15 = arith.constant 4.000000e+01 : f32
    %34 = vector.broadcast %cst_15 : f32 to vector<16x16xf32>
    %35 = arith.mulf %34, %33 : vector<16x16xf32>
    %36 = math.exp %35 : vector<16x16xf32>
    %cst_16 = arith.constant 0.000000e+00 : f32
    %37 = vector.broadcast %cst_16 : f32 to vector<16x16xf32>
    %38 = arith.select %30, %36, %37 : vector<16x16xi1>, vector<16x16xf32>
    %cst_17 = arith.constant dense<0.000000e+00> : vector<16xf32>
    %39 = vector.multi_reduction <add>, %38, %cst_17 [1] : vector<16x16xf32> to vector<16xf32>
    %40 = vector.shape_cast %39 : vector<16xf32> to vector<16x1xf32>
    %cst_18 = arith.constant 0.000000e+00 : f32
    %41 = vector.broadcast %cst_18 : f32 to vector<16x16xf32>
    %42 = arith.select %31, %36, %41 : vector<16x16xi1>, vector<16x16xf32>
    %cst_19 = arith.constant dense<0.000000e+00> : vector<16xf32>
    %43 = vector.multi_reduction <add>, %42, %cst_19 [1] : vector<16x16xf32> to vector<16xf32>
    %44 = vector.shape_cast %43 : vector<16xf32> to vector<16x1xf32>
    %45 = arith.addf %40, %44 : vector<16x1xf32>
    %cst_20 = arith.constant 0.000000e+00 : f32
    %46 = vector.broadcast %cst_20 : f32 to vector<16x1xf32>
    %47 = arith.cmpf ogt, %45, %46 : vector<16x1xf32>
    %cst_21 = arith.constant 1.000000e-30 : f32
    %48 = vector.broadcast %cst_21 : f32 to vector<16x1xf32>
    %49 = arith.maximumf %45, %48 : vector<16x1xf32>
    %50 = arith.divf %40, %49 : vector<16x1xf32>
    %cst_22 = arith.constant 1.000000e+00 : f32
    %51 = vector.broadcast %cst_22 : f32 to vector<16x1xf32>
    %52 = arith.subf %51, %50 : vector<16x1xf32>
    %cst_23 = arith.constant 0.000000e+00 : f32
    %53 = vector.broadcast %cst_23 : f32 to vector<16x1xf32>
    %54 = arith.select %47, %52, %53 : vector<16x1xi1>, vector<16x1xf32>
    %cst_24 = arith.constant 4.000000e+00 : f32
    %55 = vector.broadcast %cst_24 : f32 to vector<16x16xf32>
    %56 = arith.mulf %55, %15 : vector<16x16xf32>
    %c0_25 = arith.constant 0 : index
    %c0_26 = arith.constant 0 : index
    %57 = vector.load %arg6[%c0_25, %c0_26] : memref<16x3xf32, #tpu.memory_space<vmem>>, vector<16x3xf32>
    %cst_27 = arith.constant 4.000000e+00 : f32
    %58 = vector.broadcast %cst_27 : f32 to vector<16x3xf32>
    %59 = arith.mulf %58, %57 : vector<16x3xf32>
    %cst_28 = arith.constant 0.000000e+00 : f32
    %60 = vector.broadcast %cst_28 : f32 to vector<16x1xf32>
    %cst_29 = arith.constant 0.000000e+00 : f32
    %61 = vector.broadcast %cst_29 : f32 to vector<16x1xf32>
    %62 = vector.extract_strided_slice %59 {offsets = [0, 0], sizes = [16, 1], strides = [1, 1]} : vector<16x3xf32> to vector<16x1xf32>
    %63 = vector.broadcast %62 : vector<16x1xf32> to vector<16x16xf32>
    %64 = arith.subf %63, %56 : vector<16x16xf32>
    %cst_30 = arith.constant -0.088240318 : f32
    %65 = vector.broadcast %cst_30 : f32 to vector<16x16xf32>
    %66 = arith.cmpf ogt, %64, %65 : vector<16x16xf32>
    %67 = arith.andi %66, %31 : vector<16x16xi1>
    %cst_31 = arith.constant 0.000000e+00 : f32
    %68 = vector.broadcast %cst_31 : f32 to vector<16x16xf32>
    %69 = arith.maximumf %64, %68 : vector<16x16xf32>
    %70 = math.absf %64 : vector<16x16xf32>
    %cst_32 = arith.constant 0.000000e+00 : f32
    %71 = vector.broadcast %cst_32 : f32 to vector<16x16xf32>
    %72 = arith.subf %71, %70 : vector<16x16xf32>
    %73 = math.exp %72 : vector<16x16xf32>
    %cst_33 = arith.constant 1.000000e+00 : f32
    %74 = vector.broadcast %cst_33 : f32 to vector<16x16xf32>
    %75 = arith.addf %74, %73 : vector<16x16xf32>
    %76 = math.log %75 : vector<16x16xf32>
    %77 = arith.addf %69, %76 : vector<16x16xf32>
    %cst_34 = arith.constant 0.000000e+00 : f32
    %78 = vector.broadcast %cst_34 : f32 to vector<16x16xf32>
    %79 = arith.select %67, %77, %78 : vector<16x16xi1>, vector<16x16xf32>
    %cst_35 = arith.constant dense<0.000000e+00> : vector<16xf32>
    %80 = vector.multi_reduction <add>, %79, %cst_35 [1] : vector<16x16xf32> to vector<16xf32>
    %81 = vector.shape_cast %80 : vector<16xf32> to vector<16x1xf32>
    %82 = arith.addf %60, %81 : vector<16x1xf32>
    %cst_36 = arith.constant 1.000000e+00 : f32
    %cst_37 = arith.constant 0.000000e+00 : f32
    %83 = vector.broadcast %cst_36 : f32 to vector<16x16xf32>
    %84 = vector.broadcast %cst_37 : f32 to vector<16x16xf32>
    %85 = arith.select %67, %83, %84 : vector<16x16xi1>, vector<16x16xf32>
    %cst_38 = arith.constant dense<0.000000e+00> : vector<16xf32>
    %86 = vector.multi_reduction <add>, %85, %cst_38 [1] : vector<16x16xf32> to vector<16xf32>
    %87 = vector.shape_cast %86 : vector<16xf32> to vector<16x1xf32>
    %88 = arith.addf %61, %87 : vector<16x1xf32>
    %89 = vector.extract_strided_slice %59 {offsets = [0, 1], sizes = [16, 1], strides = [1, 1]} : vector<16x3xf32> to vector<16x1xf32>
    %90 = vector.broadcast %89 : vector<16x1xf32> to vector<16x16xf32>
    %91 = arith.subf %90, %56 : vector<16x16xf32>
    %cst_39 = arith.constant -0.088240318 : f32
    %92 = vector.broadcast %cst_39 : f32 to vector<16x16xf32>
    %93 = arith.cmpf ogt, %91, %92 : vector<16x16xf32>
    %94 = arith.andi %93, %31 : vector<16x16xi1>
    %cst_40 = arith.constant 0.000000e+00 : f32
    %95 = vector.broadcast %cst_40 : f32 to vector<16x16xf32>
    %96 = arith.maximumf %91, %95 : vector<16x16xf32>
    %97 = math.absf %91 : vector<16x16xf32>
    %cst_41 = arith.constant 0.000000e+00 : f32
    %98 = vector.broadcast %cst_41 : f32 to vector<16x16xf32>
    %99 = arith.subf %98, %97 : vector<16x16xf32>
    %100 = math.exp %99 : vector<16x16xf32>
    %cst_42 = arith.constant 1.000000e+00 : f32
    %101 = vector.broadcast %cst_42 : f32 to vector<16x16xf32>
    %102 = arith.addf %101, %100 : vector<16x16xf32>
    %103 = math.log %102 : vector<16x16xf32>
    %104 = arith.addf %96, %103 : vector<16x16xf32>
    %cst_43 = arith.constant 0.000000e+00 : f32
    %105 = vector.broadcast %cst_43 : f32 to vector<16x16xf32>
    %106 = arith.select %94, %104, %105 : vector<16x16xi1>, vector<16x16xf32>
    %cst_44 = arith.constant dense<0.000000e+00> : vector<16xf32>
    %107 = vector.multi_reduction <add>, %106, %cst_44 [1] : vector<16x16xf32> to vector<16xf32>
    %108 = vector.shape_cast %107 : vector<16xf32> to vector<16x1xf32>
    %109 = arith.addf %82, %108 : vector<16x1xf32>
    %cst_45 = arith.constant 1.000000e+00 : f32
    %cst_46 = arith.constant 0.000000e+00 : f32
    %110 = vector.broadcast %cst_45 : f32 to vector<16x16xf32>
    %111 = vector.broadcast %cst_46 : f32 to vector<16x16xf32>
    %112 = arith.select %94, %110, %111 : vector<16x16xi1>, vector<16x16xf32>
    %cst_47 = arith.constant dense<0.000000e+00> : vector<16xf32>
    %113 = vector.multi_reduction <add>, %112, %cst_47 [1] : vector<16x16xf32> to vector<16xf32>
    %114 = vector.shape_cast %113 : vector<16xf32> to vector<16x1xf32>
    %115 = arith.addf %88, %114 : vector<16x1xf32>
    %116 = vector.extract_strided_slice %59 {offsets = [0, 2], sizes = [16, 1], strides = [1, 1]} : vector<16x3xf32> to vector<16x1xf32>
    %117 = vector.broadcast %116 : vector<16x1xf32> to vector<16x16xf32>
    %118 = arith.subf %117, %56 : vector<16x16xf32>
    %cst_48 = arith.constant -0.088240318 : f32
    %119 = vector.broadcast %cst_48 : f32 to vector<16x16xf32>
    %120 = arith.cmpf ogt, %118, %119 : vector<16x16xf32>
    %121 = arith.andi %120, %31 : vector<16x16xi1>
    %cst_49 = arith.constant 0.000000e+00 : f32
    %122 = vector.broadcast %cst_49 : f32 to vector<16x16xf32>
    %123 = arith.maximumf %118, %122 : vector<16x16xf32>
    %124 = math.absf %118 : vector<16x16xf32>
    %cst_50 = arith.constant 0.000000e+00 : f32
    %125 = vector.broadcast %cst_50 : f32 to vector<16x16xf32>
    %126 = arith.subf %125, %124 : vector<16x16xf32>
    %127 = math.exp %126 : vector<16x16xf32>
    %cst_51 = arith.constant 1.000000e+00 : f32
    %128 = vector.broadcast %cst_51 : f32 to vector<16x16xf32>
    %129 = arith.addf %128, %127 : vector<16x16xf32>
    %130 = math.log %129 : vector<16x16xf32>
    %131 = arith.addf %123, %130 : vector<16x16xf32>
    %cst_52 = arith.constant 0.000000e+00 : f32
    %132 = vector.broadcast %cst_52 : f32 to vector<16x16xf32>
    %133 = arith.select %121, %131, %132 : vector<16x16xi1>, vector<16x16xf32>
    %cst_53 = arith.constant dense<0.000000e+00> : vector<16xf32>
    %134 = vector.multi_reduction <add>, %133, %cst_53 [1] : vector<16x16xf32> to vector<16xf32>
    %135 = vector.shape_cast %134 : vector<16xf32> to vector<16x1xf32>
    %136 = arith.addf %109, %135 : vector<16x1xf32>
    %cst_54 = arith.constant 1.000000e+00 : f32
    %cst_55 = arith.constant 0.000000e+00 : f32
    %137 = vector.broadcast %cst_54 : f32 to vector<16x16xf32>
    %138 = vector.broadcast %cst_55 : f32 to vector<16x16xf32>
    %139 = arith.select %121, %137, %138 : vector<16x16xi1>, vector<16x16xf32>
    %cst_56 = arith.constant dense<0.000000e+00> : vector<16xf32>
    %140 = vector.multi_reduction <add>, %139, %cst_56 [1] : vector<16x16xf32> to vector<16xf32>
    %141 = vector.shape_cast %140 : vector<16xf32> to vector<16x1xf32>
    %142 = arith.addf %115, %141 : vector<16x1xf32>
    %cst_57 = arith.constant 0.000000e+00 : f32
    %143 = vector.broadcast %cst_57 : f32 to vector<16x1xf32>
    %144 = arith.cmpf ogt, %142, %143 : vector<16x1xf32>
    %145 = arith.andi %27, %144 : vector<16x1xi1>
    %cst_58 = arith.constant 1.000000e+00 : f32
    %146 = vector.broadcast %cst_58 : f32 to vector<16x1xf32>
    %147 = arith.maximumf %142, %146 : vector<16x1xf32>
    %148 = arith.divf %136, %147 : vector<16x1xf32>
    %149 = arith.mulf %54, %148 : vector<16x1xf32>
    %cst_59 = arith.constant 0.000000e+00 : f32
    %150 = vector.broadcast %cst_59 : f32 to vector<16x1xf32>
    %151 = arith.select %145, %149, %150 : vector<16x1xi1>, vector<16x1xf32>
    %c0_60 = arith.constant 0 : index
    %c0_61 = arith.constant 0 : index
    %152 = vector.load %arg7[%c0_60, %c0_61] : memref<16x1xf32, #tpu.memory_space<vmem>>, vector<16x1xf32>
    tpu.vector_store %arg7[%c0_60, %c0_61], %151 {strides = array<i32>} : memref<16x1xf32, #tpu.memory_space<vmem>>, vector<16x1xf32>,
    %cst_62 = arith.constant 0.000000e+00 : f32
    %153 = vector.broadcast %cst_62 : f32 to vector<16x1xf32>
    %154 = arith.select %27, %142, %153 : vector<16x1xi1>, vector<16x1xf32>
    %c0_63 = arith.constant 0 : index
    %c0_64 = arith.constant 0 : index
    %155 = vector.load %arg8[%c0_63, %c0_64] : memref<16x1xf32, #tpu.memory_space<vmem>>, vector<16x1xf32>
    tpu.vector_store %arg8[%c0_63, %c0_64], %154 {strides = array<i32>} : memref<16x1xf32, #tpu.memory_space<vmem>>, vector<16x1xf32>,
    return
  }
  func.func @transform_0(%arg0: i32) -> (i32, i32) {
    %c0_i32 = arith.constant 0 : i32
    %c0_i32_0 = arith.constant 0 : i32
    return %arg0, %c0_i32 : i32, i32
  }
  func.func @transform_1(%arg0: i32) -> (i32, i32) {
    %c0_i32 = arith.constant 0 : i32
    %c0_i32_0 = arith.constant 0 : i32
    %c0_i32_1 = arith.constant 0 : i32
    return %c0_i32, %c0_i32_0 : i32, i32
  }
  func.func @transform_2(%arg0: i32) -> (i32, i32) {
    %c0_i32 = arith.constant 0 : i32
    %c0_i32_0 = arith.constant 0 : i32
    %c0_i32_1 = arith.constant 0 : i32
    return %c0_i32, %c0_i32_0 : i32, i32
  }
  func.func @transform_3(%arg0: i32) -> (i32, i32) {
    %c0_i32 = arith.constant 0 : i32
    %c0_i32_0 = arith.constant 0 : i32
    return %arg0, %c0_i32 : i32, i32
  }
  func.func @transform_4(%arg0: i32) -> (i32, i32) {
    %c0_i32 = arith.constant 0 : i32
    %c0_i32_0 = arith.constant 0 : i32
    %c0_i32_1 = arith.constant 0 : i32
    return %c0_i32, %c0_i32_0 : i32, i32
  }
  func.func @transform_5(%arg0: i32) -> (i32, i32) {
    %c0_i32 = arith.constant 0 : i32
    %c0_i32_0 = arith.constant 0 : i32
    return %arg0, %c0_i32 : i32, i32
  }
  func.func @transform_6(%arg0: i32) -> (i32, i32) {
    %c0_i32 = arith.constant 0 : i32
    %c0_i32_0 = arith.constant 0 : i32
    return %arg0, %c0_i32 : i32, i32
  }
  func.func @transform_7(%arg0: i32) -> (i32, i32) {
    %c0_i32 = arith.constant 0 : i32
    %c0_i32_0 = arith.constant 0 : i32
    return %arg0, %c0_i32 : i32, i32
  }
}

</mosaic_0001>

<llo_original>
// kernel: tpu_custom_call.1
$region0: #{tpu_custom_call.1}
  #allocation0 [shape = 'u32[]', space=smem, size = 0x4, offset = 0x4, fixed_abs, tag = 'smem constant byte address 0x4 - core index']
  #allocation1 [shape = 'u32[144,128]{1,0:T(1,128)}', space=vmem, size = 0x12000, scoped, tag = 'internal scratch']
  %s0 = inlined_call_operand.vmem [shape: f32[16,32], index: 0, kind: input, shape index: {}]
  %s1 = inlined_call_operand.vmem [shape: f32[16,32], index: 1, kind: input, shape index: {}]
  %s2 = inlined_call_operand.vmem [shape: f32[1,16], index: 2, kind: input, shape index: {}]
  %s3 = inlined_call_operand.vmem [shape: s32[16,1], index: 3, kind: input, shape index: {}]
  %s4 = inlined_call_operand.vmem [shape: s32[1,16], index: 4, kind: input, shape index: {}]
  %s5 = inlined_call_operand.vmem [shape: f32[16,3], index: 5, kind: input, shape index: {}]
  %s6 = inlined_call_operand.vmem [shape: f32[16,1], index: 6, kind: output, shape index: {0}]
  %s7 = inlined_call_operand.vmem [shape: f32[16,1], index: 7, kind: output, shape index: {1}]
  %8 = xla_tuple %s6, %s7
  %s9 = sld [smem:[#allocation0]]
  $region42: #{tpu_custom_call.1} parent=0
    _
  %s11 = ssub.s32 1, %s9
  %s12 = scalar_select 0, %s11, %s9
  // Predicated region
  $region2: #{tpu_custom_call.1} parent=0 // pred_check
    _
  $region3: #{tpu_custom_call.1} parent=0 // pred_check_branch
    %14 = sbr.rel (0) target = $region5
  $region4: #{tpu_custom_call.1} parent=0 // pred_region
    _
  $region5: #{tpu_custom_call.1} parent=0 // pred_fallthru
    _
  // Predicated region
  $region6: #{tpu_custom_call.1} parent=0 // pred_check
    _
  $region7: #{tpu_custom_call.1} parent=0 // pred_check_branch
    %16 = sbr.rel (0) target = $region9
  $region8: #{tpu_custom_call.1} parent=0 // pred_region
    _
  $region9: #{tpu_custom_call.1} parent=0 // pred_fallthru
    _
  // Predicated region
  $region10: #{tpu_custom_call.1} parent=0 // pred_check
    _
  $region11: #{tpu_custom_call.1} parent=0 // pred_check_branch
    %18 = sbr.rel (0) target = $region13
  $region12: #{tpu_custom_call.1} parent=0 // pred_region
    _
  $region13: #{tpu_custom_call.1} parent=0 // pred_fallthru
    _
  // Predicated region
  $region14: #{tpu_custom_call.1} parent=0 // pred_check
    _
  $region15: #{tpu_custom_call.1} parent=0 // pred_check_branch
    %20 = sbr.rel (0) target = $region17
  $region16: #{tpu_custom_call.1} parent=0 // pred_region
    _
  $region17: #{tpu_custom_call.1} parent=0 // pred_fallthru
    _
  // Predicated region
  $region18: #{tpu_custom_call.1} parent=0 // pred_check
    _
  $region19: #{tpu_custom_call.1} parent=0 // pred_check_branch
    %22 = sbr.rel (0) target = $region21
  $region20: #{tpu_custom_call.1} parent=0 // pred_region
    _
  $region21: #{tpu_custom_call.1} parent=0 // pred_fallthru
    _
  // Predicated region
  $region22: #{tpu_custom_call.1} parent=0 // pred_check
    _
  $region23: #{tpu_custom_call.1} parent=0 // pred_check_branch
    %24 = sbr.rel (0) target = $region25
  $region24: #{tpu_custom_call.1} parent=0 // pred_region
    _
  $region25: #{tpu_custom_call.1} parent=0 // pred_fallthru
    _
  %v25 = vld [vmem:[%s0] sm:$0xff]
  %v26 = vld [vmem:[%s0 + $0x8] sm:$0xff]
  %v27 = vld [vmem:[%s1] sm:$0xff]
  %v28 = vld [vmem:[%s1 + $0x8] sm:$0xff]
  %v29 = vmul.f32 %v25, %v25
  %v30 = vmul.f32 %v26, %v26
  %vm31 = vcmask 261120
  %v32 = vsel %vm31, %v29, 0.0
  %33 = vadd.xlane.f32.xlu0 %v32
  %v34 = vpop.xlane.xlu0 %33
  %v35 = vsel %vm31, %v30, 0.0
  %36 = vadd.xlane.f32.xlu0 %v35
  %v37 = vpop.xlane.xlu0 %36
  %v39 = vsel %vm31, %v25, 0
  %v42 = vsel %vm31, %v26, 0
  %v45 = vsel %vm31, %v27, 0
  %v48 = vsel %vm31, %v28, 0
  %50 = vmatprep.subr.mxu0 0.0
  %51 = vmatpush1.xpose.msra.mxu0 %v45
  %52 = vmatprep.subr.mxu0 0.0
  %53 = vmatpush1.xpose.msra.mxu0 %v48
  %54 = vmatprep.subr.mxu0 0.0
  %55 = vmatpush1.xpose.msra.mxu0 0.0
  %56 = vmatprep.subr.mxu0 0.0
  %57 = vmatpush1.xpose.msra.mxu0 0.0
  %58 = vmatprep.subr.mxu0 0.0
  %59 = vmatpush1.xpose.msra.mxu0 0.0
  %60 = vmatprep.subr.mxu0 0.0
  %61 = vmatpush1.xpose.msra.mxu0 0.0
  %62 = vmatprep.subr.mxu0 0.0
  %63 = vmatpush1.xpose.msra.mxu0 0.0
  %64 = vmatprep.subr.mxu0 0.0
  %65 = vmatpush1.xpose.msra.mxu0 0.0
  %66 = vmatprep.subr.mxu0 0.0
  %67 = vmatpush1.xpose.msra.mxu0 0.0
  %68 = vmatprep.subr.mxu0 0.0
  %69 = vmatpush1.xpose.msra.mxu0 0.0
  %70 = vmatprep.subr.mxu0 0.0
  %71 = vmatpush1.xpose.msra.mxu0 0.0
  %72 = vmatprep.subr.mxu0 0.0
  %73 = vmatpush1.xpose.msra.mxu0 0.0
  %74 = vmatprep.subr.mxu0 0.0
  %75 = vmatpush1.xpose.msra.mxu0 0.0
  %76 = vmatprep.subr.mxu0 0.0
  %77 = vmatpush1.xpose.msra.mxu0 0.0
  %78 = vmatprep.subr.mxu0 0.0
  %79 = vmatpush1.xpose.msra.mxu0 0.0
  %80 = vmatprep.subr.mxu0 0.0
  %81 = vmatpush1.xpose.msra.mxu0 0.0
  %82 = vmatprep.subr.mxu0 0.0
  %83 = vmatpush1.xpose.msra.mxu0 0.0
  %84 = vmatprep.subr.mxu0 0.0
  %85 = vmatpush1.xpose.msra.mxu0 0.0
  %86 = vmatprep.subr.mxu0 0.0
  %87 = vmatpush1.xpose.msra.mxu0 0.0
  %88 = vmatprep.subr.mxu0 0.0
  %89 = vmatpush1.xpose.msra.mxu0 0.0
  %90 = vmatprep.subr.mxu0 0.0
  %91 = vmatpush1.xpose.msra.mxu0 0.0
  %92 = vmatprep.subr.mxu0 0.0
  %93 = vmatpush1.xpose.msra.mxu0 0.0
  %94 = vmatprep.subr.mxu0 0.0
  %95 = vmatpush1.xpose.msra.mxu0 0.0
  %96 = vmatprep.subr.mxu0 0.0
  %97 = vmatpush1.xpose.msra.mxu0 0.0
  %98 = vmatprep.subr.mxu0 0.0
  %99 = vmatpush1.xpose.msra.mxu0 0.0
  %100 = vmatprep.subr.mxu0 0.0
  %101 = vmatpush1.xpose.msra.mxu0 0.0
  %102 = vmatprep.subr.mxu0 0.0
  %103 = vmatpush1.xpose.msra.mxu0 0.0
  %104 = vmatprep.subr.mxu0 0.0
  %105 = vmatpush1.xpose.msra.mxu0 0.0
  %106 = vmatprep.subr.mxu0 0.0
  %107 = vmatpush1.xpose.msra.mxu0 0.0
  %108 = vmatprep.subr.mxu0 0.0
  %109 = vmatpush1.xpose.msra.mxu0 0.0
  %110 = vmatprep.subr.mxu0 0.0
  %111 = vmatpush1.xpose.msra.mxu0 0.0
  %112 = vmatprep.subr.mxu0 0.0
  %113 = vmatpush1.xpose.msra.mxu0 0.0
  %114 = vmatprep.mubr.f32.mxu0 0.0
  %115 = vmatmul.mubr.f32.gmra.mrb[0].mxu0 %v39
  %v116 = vpop.f32.mrb[0].mxu0
  %v117 = vadd.f32 0.0, %v116
  %v118 = vpop.f32.mrb[0].mxu0
  %119 = vmatprep.mubr.f32.mxu0 0.0
  %120 = vmatmul.mubr.f32.gmra.mrb[0].mxu0 %v42
  %v121 = vpop.f32.mrb[0].mxu0
  %v122 = vadd.f32 0.0, %v121
  %v123 = vpop.f32.mrb[0].mxu0
  %124 = vdwg.mxu0
  %v125 = vld [vmem:[%s2] sm:$0x1]
  %v127 = vlaneseq
  %v128 = vshrl.u32 %v127, 7
  %v129 = vsub.s32 0, %v128
  %v130 = vrot.slane %v125, %v129
  %v132 = vadd.f32 %v34, %v130
  %v133 = vadd.f32 %v37, %v130
  %v134 = vmul.f32 %v117, 2.0
  %v135 = vmul.f32 %v122, 2.0
  %v136 = vsub.f32 %v132, %v134
  %v137 = vsub.f32 %v133, %v135
  %v138 = vmax.f32 %v136, 1e-12
  %v139 = vmax.f32 %v137, 1e-12
  %v140 = vrsqrt.pop %v138
  %v141 = vmul.f32 %v138, %v140
  %vm142 = vcmp.eq.f32.partialorder %v138, inf
  %v143 = vsel %vm142, %v138, %v141
  %vm144 = vcmp.eq.f32.partialorder %v138, 0.0
  %v145 = vand.u32 %v138, 2147483648
  %v146 = vsel %vm144, %v145, %v143
  %v147 = vrsqrt.pop %v139
  %v148 = vmul.f32 %v139, %v147
  %vm149 = vcmp.eq.f32.partialorder %v139, inf
  %v150 = vsel %vm149, %v139, %v148
  %vm151 = vcmp.eq.f32.partialorder %v139, 0.0
  %v152 = vand.u32 %v139, 2147483648
  %v153 = vsel %vm151, %v152, %v150
  %v154 = vld [vmem:[%s3] sm:$0xff]
  %v155 = vld [vmem:[%s3 + $0x8] sm:$0xff]
  %v156 = vld [vmem:[%s4] sm:$0x1]
  %157 = vset.pattern.permute.xlu0 0
  %158 = vperm.xlu0 %157, %v154
  %v159 = vpop.permute.xlu0 %158
  %160 = vset.pattern.permute.xlu0 0
  %161 = vperm.xlu0 %160, %v155
  %v162 = vpop.permute.xlu0 %161
  %v163 = vlaneseq
  %v164 = vshrl.u32 %v163, 7
  %v165 = vsub.s32 0, %v164
  %v166 = vrot.slane %v156, %v165
  %vm167 = vcmp.eq.s32.totalorder %v159, %v166
  %vm168 = vcmp.eq.s32.totalorder %v162, %v166
  %v169 = vlaneseq
  %v170 = vand.u32 %v169, 127
  %s171 = smul.u32 0, 16
  %v172 = vlaneseq
  %v173 = vshrl.u32 %v172, 7
  %v174 = vadd.s32 %v173, 8
  %v175 = vstv %s171
  %v176 = vadd.s32 %v175, %v173
  %v177 = vadd.s32 %v175, %v174
  %vm178 = vcmp.lt.s32.totalorder %v176, 16
  %vm179 = vcmp.lt.s32.totalorder %v177, 16
  %vm180 = vcmp.ne.s32.totalorder %v170, %v176
  %vm181 = vcmp.ne.s32.totalorder %v170, %v177
  %vm182 = vmand %vm167, %vm180
  %vm183 = vmand %vm168, %vm181
  %vm184 = vmxor %vm167, 1
  %vm185 = vmxor %vm168, 1
  %v186 = vsub.f32 1.0, %v146
  %v187 = vsub.f32 1.0, %v153
  %v188 = vmul.f32 %v186, 40.0
  %v189 = vmul.f32 %v187, 40.0
  %v190 = vmul.f32 %v188, 1.442695
  %v191 = vpow.pop %v190
  %v192 = vmul.f32 %v189, 1.442695
  %v193 = vpow.pop %v192
  %v194 = vsel %vm182, %v191, 0.0
  %v195 = vsel %vm183, %v193, 0.0
  %vm196 = vcmask 130048
  %v197 = vsel %vm196, %v194, 0.0
  %198 = vadd.xlane.f32.xlu0 %v197
  %v199 = vpop.xlane.xlu0 %198
  %v200 = vsel %vm196, %v195, 0.0
  %201 = vadd.xlane.f32.xlu0 %v200
  %v202 = vpop.xlane.xlu0 %201
  %v203 = vsel %vm184, %v191, 0.0
  %v204 = vsel %vm185, %v193, 0.0
  %v205 = vsel %vm196, %v203, 0.0
  %206 = vadd.xlane.f32.xlu0 %v205
  %v207 = vpop.xlane.xlu0 %206
  %v208 = vsel %vm196, %v204, 0.0
  %209 = vadd.xlane.f32.xlu0 %v208
  %v210 = vpop.xlane.xlu0 %209
  %v211 = vadd.f32 %v199, %v207
  %v212 = vadd.f32 %v202, %v210
  %vm213 = vcmp.gt.f32.partialorder %v211, 0.0
  %vm214 = vcmp.gt.f32.partialorder %v212, 0.0
  %v215 = vmax.f32 %v211, 1e-30
  %v216 = vmax.f32 %v212, 1e-30
  %v217 = vrcp.pop %v215
  %v218 = vmul.f32 %v199, %v217
  %v219 = vrcp.pop %v216
  %v220 = vmul.f32 %v202, %v219
  %v221 = vsub.f32 1.0, %v218
  %v222 = vsub.f32 1.0, %v220
  %v223 = vsel %vm213, %v221, 0.0
  %v224 = vsel %vm214, %v222, 0.0
  %v225 = vmul.f32 %v146, 4.0
  %v226 = vmul.f32 %v153, 4.0
  %v227 = vld [vmem:[%s5] sm:$0xff]
  %v228 = vld [vmem:[%s5 + $0x8] sm:$0xff]
  %v229 = vmul.f32 %v227, 4.0
  %v230 = vmul.f32 %v228, 4.0
  %232 = vset.pattern.permute.xlu0 0
  %233 = vperm.xlu0 %232, %v229
  %v234 = vpop.permute.xlu0 %233
  %237 = vset.pattern.permute.xlu0 0
  %238 = vperm.xlu0 %237, %v230
  %v239 = vpop.permute.xlu0 %238
  %v241 = vsub.f32 %v234, %v225
  %v242 = vsub.f32 %v239, %v226
  %vm243 = vcmp.gt.f32.partialorder %v241, -0.08824032
  %vm244 = vcmp.gt.f32.partialorder %v242, -0.08824032
  %vm245 = vmand %vm243, %vm184
  %vm246 = vmand %vm244, %vm185
  %v247 = vmax.f32 %v241, 0.0
  %v248 = vmax.f32 %v242, 0.0
  %v249 = vand.u32 2147483647, %v241
  %v250 = vand.u32 2147483647, %v242
  %v251 = vsub.f32 0.0, %v249
  %v252 = vsub.f32 0.0, %v250
  %v253 = vmul.f32 %v251, 1.442695
  %v254 = vpow.pop %v253
  %v255 = vmul.f32 %v252, 1.442695
  %v256 = vpow.pop %v255
  %v257 = vadd.f32 %v254, 1.0
  %v258 = vadd.f32 %v256, 1.0
  %v259 = vlog2.pop %v257
  %v260 = vmul.f32 %v259, 0.6931472
  %v261 = vlog2.pop %v258
  %v262 = vmul.f32 %v261, 0.6931472
  %v263 = vadd.f32 %v247, %v260
  %v264 = vadd.f32 %v248, %v262
  %v265 = vsel %vm245, %v263, 0.0
  %v266 = vsel %vm246, %v264, 0.0
  %v267 = vsel %vm196, %v265, 0.0
  %268 = vadd.xlane.f32.xlu0 %v267
  %v269 = vpop.xlane.xlu0 %268
  %v270 = vsel %vm196, %v266, 0.0
  %271 = vadd.xlane.f32.xlu0 %v270
  %v272 = vpop.xlane.xlu0 %271
  %v273 = vadd.f32 %v269, 0.0
  %v274 = vadd.f32 %v272, 0.0
  %v275 = vsel %vm245, 1.0, 0.0
  %v276 = vsel %vm246, 1.0, 0.0
  %v277 = vsel %vm196, %v275, 0.0
  %278 = vadd.xlane.f32.xlu0 %v277
  %v279 = vpop.xlane.xlu0 %278
  %v280 = vsel %vm196, %v276, 0.0
  %281 = vadd.xlane.f32.xlu0 %v280
  %v282 = vpop.xlane.xlu0 %281
  %v283 = vadd.f32 %v279, 0.0
  %v284 = vadd.f32 %v282, 0.0
  %285 = vset.pattern.permute.xlu0 1
  %286 = vperm.xlu0 %285, %v229
  %v287 = vpop.permute.xlu0 %286
  %289 = vset.pattern.permute.xlu0 1
  %290 = vperm.xlu0 %289, %v230
  %v291 = vpop.permute.xlu0 %290
  %v293 = vsub.f32 %v287, %v225
  %v294 = vsub.f32 %v291, %v226
  %vm295 = vcmp.gt.f32.partialorder %v293, -0.08824032
  %vm296 = vcmp.gt.f32.partialorder %v294, -0.08824032
  %vm297 = vmand %vm295, %vm184
  %vm298 = vmand %vm296, %vm185
  %v299 = vmax.f32 %v293, 0.0
  %v300 = vmax.f32 %v294, 0.0
  %v301 = vand.u32 2147483647, %v293
  %v302 = vand.u32 2147483647, %v294
  %v303 = vsub.f32 0.0, %v301
  %v304 = vsub.f32 0.0, %v302
  %v305 = vmul.f32 %v303, 1.442695
  %v306 = vpow.pop %v305
  %v307 = vmul.f32 %v304, 1.442695
  %v308 = vpow.pop %v307
  %v309 = vadd.f32 %v306, 1.0
  %v310 = vadd.f32 %v308, 1.0
  %v311 = vlog2.pop %v309
  %v312 = vmul.f32 %v311, 0.6931472
  %v313 = vlog2.pop %v310
  %v314 = vmul.f32 %v313, 0.6931472
  %v315 = vadd.f32 %v299, %v312
  %v316 = vadd.f32 %v300, %v314
  %v317 = vsel %vm297, %v315, 0.0
  %v318 = vsel %vm298, %v316, 0.0
  %v319 = vsel %vm196, %v317, 0.0
  %320 = vadd.xlane.f32.xlu0 %v319
  %v321 = vpop.xlane.xlu0 %320
  %v322 = vsel %vm196, %v318, 0.0
  %323 = vadd.xlane.f32.xlu0 %v322
  %v324 = vpop.xlane.xlu0 %323
  %v325 = vadd.f32 %v273, %v321
  %v326 = vadd.f32 %v274, %v324
  %v327 = vsel %vm297, 1.0, 0.0
  %v328 = vsel %vm298, 1.0, 0.0
  %v329 = vsel %vm196, %v327, 0.0
  %330 = vadd.xlane.f32.xlu0 %v329
  %v331 = vpop.xlane.xlu0 %330
  %v332 = vsel %vm196, %v328, 0.0
  %333 = vadd.xlane.f32.xlu0 %v332
  %v334 = vpop.xlane.xlu0 %333
  %v335 = vadd.f32 %v283, %v331
  %v336 = vadd.f32 %v284, %v334
  %337 = vset.pattern.permute.xlu0 2
  %338 = vperm.xlu0 %337, %v229
  %v339 = vpop.permute.xlu0 %338
  %341 = vset.pattern.permute.xlu0 2
  %342 = vperm.xlu0 %341, %v230
  %v343 = vpop.permute.xlu0 %342
  %v345 = vsub.f32 %v339, %v225
  %v346 = vsub.f32 %v343, %v226
  %vm347 = vcmp.gt.f32.partialorder %v345, -0.08824032
  %vm348 = vcmp.gt.f32.partialorder %v346, -0.08824032
  %vm349 = vmand %vm347, %vm184
  %vm350 = vmand %vm348, %vm185
  %v351 = vmax.f32 %v345, 0.0
  %v352 = vmax.f32 %v346, 0.0
  %v353 = vand.u32 2147483647, %v345
  %v354 = vand.u32 2147483647, %v346
  %v355 = vsub.f32 0.0, %v353
  %v356 = vsub.f32 0.0, %v354
  %v357 = vmul.f32 %v355, 1.442695
  %v358 = vpow.pop %v357
  %v359 = vmul.f32 %v356, 1.442695
  %v360 = vpow.pop %v359
  %v361 = vadd.f32 %v358, 1.0
  %v362 = vadd.f32 %v360, 1.0
  %v363 = vlog2.pop %v361
  %v364 = vmul.f32 %v363, 0.6931472
  %v365 = vlog2.pop %v362
  %v366 = vmul.f32 %v365, 0.6931472
  %v367 = vadd.f32 %v351, %v364
  %v368 = vadd.f32 %v352, %v366
  %v369 = vsel %vm349, %v367, 0.0
  %v370 = vsel %vm350, %v368, 0.0
  %v371 = vsel %vm196, %v369, 0.0
  %372 = vadd.xlane.f32.xlu0 %v371
  %v373 = vpop.xlane.xlu0 %372
  %v374 = vsel %vm196, %v370, 0.0
  %375 = vadd.xlane.f32.xlu0 %v374
  %v376 = vpop.xlane.xlu0 %375
  %v377 = vadd.f32 %v325, %v373
  %v378 = vadd.f32 %v326, %v376
  %v379 = vsel %vm349, 1.0, 0.0
  %v380 = vsel %vm350, 1.0, 0.0
  %v381 = vsel %vm196, %v379, 0.0
  %382 = vadd.xlane.f32.xlu0 %v381
  %v383 = vpop.xlane.xlu0 %382
  %v384 = vsel %vm196, %v380, 0.0
  %385 = vadd.xlane.f32.xlu0 %v384
  %v386 = vpop.xlane.xlu0 %385
  %v387 = vadd.f32 %v335, %v383
  %v388 = vadd.f32 %v336, %v386
  %vm389 = vcmp.gt.f32.partialorder %v387, 0.0
  %vm390 = vcmp.gt.f32.partialorder %v388, 0.0
  %vm391 = vmand %vm178, %vm389
  %vm392 = vmand %vm179, %vm390
  %v393 = vmax.f32 %v387, 1.0
  %v394 = vmax.f32 %v388, 1.0
  %v395 = vrcp.pop %v393
  %v396 = vmul.f32 %v377, %v395
  %v397 = vrcp.pop %v394
  %v398 = vmul.f32 %v378, %v397
  %v399 = vmul.f32 %v223, %v396
  %v400 = vmul.f32 %v224, %v398
  %v401 = vsel %vm391, %v399, 0.0
  %v402 = vsel %vm392, %v400, 0.0
  %vm403 = vcmask 7168
  %404 = vst.msk [vmem:[%s6] sm:$0xff] %vm403, %v401
  %405 = vst.msk [vmem:[%s6 + $0x8] sm:$0xff] %vm403, %v402
  %v406 = vsel %vm178, %v387, 0.0
  %v407 = vsel %vm179, %v388, 0.0
  %408 = vst.msk [vmem:[%s7] sm:$0xff] %vm403, %v406
  %409 = vst.msk [vmem:[%s7 + $0x8] sm:$0xff] %vm403, %v407
  // Predicated region
  $region26: #{tpu_custom_call.1} parent=0 // pred_check
    _
  $region27: #{tpu_custom_call.1} parent=0 // pred_check_branch
    %411 = sbr.rel (0) target = $region29
  $region28: #{tpu_custom_call.1} parent=0 // pred_region
    _
  $region29: #{tpu_custom_call.1} parent=0 // pred_fallthru
    _
  // Predicated region
  $region30: #{tpu_custom_call.1} parent=0 // pred_check
    _
  $region31: #{tpu_custom_call.1} parent=0 // pred_check_branch
    %413 = sbr.rel (0) target = $region33
  $region32: #{tpu_custom_call.1} parent=0 // pred_region
    _
  $region33: #{tpu_custom_call.1} parent=0 // pred_fallthru
    _
  // Predicated region
  $region34: #{tpu_custom_call.1} parent=0 // pred_check
    _
  $region35: #{tpu_custom_call.1} parent=0 // pred_check_branch
    %415 = sbr.rel (0) target = $region37
  $region36: #{tpu_custom_call.1} parent=0 // pred_region
    _
  $region37: #{tpu_custom_call.1} parent=0 // pred_fallthru
    _
  // Predicated region
  $region38: #{tpu_custom_call.1} parent=0 // pred_check
    _
  $region39: #{tpu_custom_call.1} parent=0 // pred_check_branch
    %417 = sbr.rel (0) target = $region41
  $region40: #{tpu_custom_call.1} parent=0 // pred_region
    _
  $region41: #{tpu_custom_call.1} parent=0 // pred_fallthru
    _

</llo_original>
